<compile_context>
chip_gen: v5e
topology: v5e:2x2
jax: 0.10.0
libtpu: 0.0.40
codegen_flags: <defaults>
</compile_context>

<pallas_src>
import jax
import jax.numpy as jnp
from jax.experimental import pallas as pl
from jax.experimental.pallas import tpu as pltpu


def _round_up(x: int, m: int) -> int:
    return ((x + m - 1) // m) * m


def linear_kernel(y_ref, w_ref, b_ref, o_ref):
    # y_ref: (TB, IN), w_ref: (IN, OUT), b_ref: (1, OUT), o_ref: (TB, OUT)
    # f32 accumulate on the MXU; bias add on the VPU; cast only on the store.
    acc = jnp.dot(y_ref[...], w_ref[...], preferred_element_type=jnp.float32)
    o_ref[...] = (acc + b_ref[...].astype(jnp.float32)).astype(o_ref.dtype)


def prepare_params(weight, bias):
    """One-time parameter prep (hoisted out of the hot path).

    weight: (128, 10)  (PyTorch convention: out_features x in_features)
    bias:   (128,)
    returns (w_t, b2d) with w_t (10, 128) and b2d (1, 128).
    """
    return weight.T, bias.reshape(1, -1)


def _choose_tile(B: int, tb: int) -> int:
    """Pick the batch tile TB.

    - If the whole batch fits in one tile, use a single full-array block
      (block_shape == array shape is legal even when B % 8 != 0).
    - Otherwise TB must be a multiple of 8 (sublane divisibility rule).
      On large batches cap TB so the grid keeps >= ~4 steps (megacore
      sharding on v7x), with a floor of 1024 rows/step to amortize the
      ~0.35 us per-step overhead.
    """
    tb = max(8, (tb // 8) * 8)
    if B <= tb:
        return B
    if B > 4 * 1024:
        tb = min(tb, max(1024, _round_up(pl.cdiv(B, 4), 8)))
    return tb


def ace_model_g_forward(y, w_t, b2d, *, tb=4096, out_dtype=None):
    """Forward pass of aceModel_g:  out = y @ W.T + b.

    y:   (B, 10)    activations (f32; bf16 also accepted, f32 accumulate kept)
    w_t: (10, 128)  pre-transposed weight
    b2d: (1, 128)   pre-reshaped bias
    out_dtype: pass jnp.bfloat16 to halve the dominant HBM writeback traffic
               when the consumer tolerates bf16; default y.dtype (exact
               PyTorch-f32 semantics).
    returns (B, 128) array of out_dtype.
    """
    B, in_f = y.shape
    out_f = w_t.shape[1]
    if out_dtype is None:
        out_dtype = y.dtype
    out_dtype = jnp.dtype(out_dtype)

    TB = _choose_tile(B, tb)
    # Ragged last block is handled by Pallas (boundary reads padded, boundary
    # stores masked) -> no jnp.pad of y and no out[:B] slice afterwards.
    grid = (pl.cdiv(B, TB),)

    cost = pl.CostEstimate(
        flops=2 * B * in_f * out_f,
        transcendentals=0,
        bytes_accessed=(B * in_f * y.dtype.itemsize
                        + in_f * out_f * w_t.dtype.itemsize
                        + out_f * b2d.dtype.itemsize
                        + B * out_f * out_dtype.itemsize),
    )

    compiler_kwargs = dict(dimension_semantics=("parallel",))
    if TB >= 8192:
        # 8192-row double-buffered tiles (~16 MiB) exceed v5e's 16 MiB scoped
        # VMEM default; budget explicitly (well within v7x's 64 MiB physical).
        compiler_kwargs["vmem_limit_bytes"] = 32 << 20

    return pl.pallas_call(
        linear_kernel,
        out_shape=jax.ShapeDtypeStruct((B, out_f), out_dtype),
        grid=grid,
        in_specs=[
            pl.BlockSpec((TB, in_f), lambda i: (i, 0)),     # batch-tiled acts
            pl.BlockSpec((in_f, out_f), lambda i: (0, 0)),  # resident weight
            pl.BlockSpec((1, out_f), lambda i: (0, 0)),     # resident bias
        ],
        out_specs=pl.BlockSpec((TB, out_f), lambda i: (i, 0)),  # lane-dense (128)
        compiler_params=pltpu.CompilerParams(**compiler_kwargs),
        cost_estimate=cost,
    )(y, w_t, b2d)


if __name__ == "__main__":
    key = jax.random.PRNGKey(0)
    k_w, k_b, k_y1, k_y2 = jax.random.split(key, 4)

    IN, OUT = 10, 128

    # Deterministic parameter init (mimicking nn.Linear's uniform init range).
    bound = 1.0 / (IN ** 0.5)
    weight = jax.random.uniform(k_w, (OUT, IN), jnp.float32, -bound, bound)
    bias = jax.random.uniform(k_b, (OUT,), jnp.float32, -bound, bound)

    # One-time parameter prep (outside the hot path).
    w_t, b2d = prepare_params(weight, bias)

    # Case 1: small batch, single full-array block, f32 output (exact numerics).
    B1 = 8
    y1 = jax.random.normal(k_y1, (B1, IN), jnp.float32)
    out1 = ace_model_g_forward(y1, w_t, b2d)
    jax.block_until_ready(out1)
    ref1 = y1 @ weight.T + bias
    assert out1.shape == (B1, OUT) and out1.dtype == jnp.float32
    assert jnp.allclose(out1, ref1, atol=1e-5, rtol=1e-5)

    # Case 2: batch not divisible by the tile -> multi-step grid with a ragged
    # (masked) last block, no pad/slice; bf16 output path (halved writeback).
    B2 = 20
    y2 = jax.random.normal(k_y2, (B2, IN), jnp.float32)
    out2 = ace_model_g_forward(y2, w_t, b2d, tb=8, out_dtype=jnp.bfloat16)
    jax.block_until_ready(out2)
    ref2 = y2 @ weight.T + bias
    assert out2.shape == (B2, OUT) and out2.dtype == jnp.bfloat16
    assert jnp.allclose(out2.astype(jnp.float32), ref2, atol=3e-2, rtol=3e-2)

    print("KERNEL_OK")
</pallas_src>

<mosaic_0001>
module attributes {stable_mosaic.version = 11 : i64} {
  func.func @linear_kernel(%arg0: i32, %arg1: memref<8x10xf32, #tpu.memory_space<vmem>>, %arg2: memref<10x128xf32, #tpu.memory_space<vmem>>, %arg3: memref<1x128xf32, #tpu.memory_space<vmem>>, %arg4: memref<8x128xf32, #tpu.memory_space<vmem>>) attributes {dimension_semantics = [#tpu.dimension_semantics<parallel>], iteration_bounds = array<i64: 1>, scalar_prefetch = 0 : i64, scratch_operands = 0 : i64, tpu.core_type = #tpu.core_type<tc>, window_params = [{transform_indices = @transform_0, window_bounds = array<i64: 8, 10>}, {pipeline_mode = #tpu.pipeline_mode<synchronous>, transform_indices = @transform_1, window_bounds = array<i64: 10, 128>}, {pipeline_mode = #tpu.pipeline_mode<synchronous>, transform_indices = @transform_2, window_bounds = array<i64: 1, 128>}, {transform_indices = @transform_3, window_bounds = array<i64: 8, 128>}]} {
    %c0 = arith.constant 0 : index
    %c0_0 = arith.constant 0 : index
    %0 = vector.load %arg1[%c0, %c0_0] : memref<8x10xf32, #tpu.memory_space<vmem>>, vector<8x10xf32>
    %c0_1 = arith.constant 0 : index
    %c0_2 = arith.constant 0 : index
    %1 = vector.load %arg2[%c0_1, %c0_2] : memref<10x128xf32, #tpu.memory_space<vmem>>, vector<10x128xf32>
    %cst = arith.constant dense<0.000000e+00> : vector<8x128xf32>
    %2 = tpu.matmul %0, %1, %cst {dimension_numbers = #tpu.dot_dimension_numbers<[1], [0], [0], [1], [0, 0, 1, 1], [], []>} : vector<8x10xf32>, vector<10x128xf32>, vector<8x128xf32> -> vector<8x128xf32>
    %c0_3 = arith.constant 0 : index
    %c0_4 = arith.constant 0 : index
    %3 = vector.load %arg3[%c0_3, %c0_4] : memref<1x128xf32, #tpu.memory_space<vmem>>, vector<1x128xf32>
    %4 = vector.broadcast %3 : vector<1x128xf32> to vector<8x128xf32>
    %5 = arith.addf %2, %4 : vector<8x128xf32>
    %c0_5 = arith.constant 0 : index
    %c0_6 = arith.constant 0 : index
    %6 = vector.load %arg4[%c0_5, %c0_6] : memref<8x128xf32, #tpu.memory_space<vmem>>, vector<8x128xf32>
    tpu.vector_store %arg4[%c0_5, %c0_6], %5 {strides = array<i32>} : memref<8x128xf32, #tpu.memory_space<vmem>>, vector<8x128xf32>,
    return
  }
  func.func @transform_0(%arg0: i32) -> (i32, i32) {
    %c0_i32 = arith.constant 0 : i32
    %c0_i32_0 = arith.constant 0 : i32
    return %arg0, %c0_i32 : i32, i32
  }
  func.func @transform_1(%arg0: i32) -> (i32, i32) {
    %c0_i32 = arith.constant 0 : i32
    %c0_i32_0 = arith.constant 0 : i32
    %c0_i32_1 = arith.constant 0 : i32
    return %c0_i32, %c0_i32_0 : i32, i32
  }
  func.func @transform_2(%arg0: i32) -> (i32, i32) {
    %c0_i32 = arith.constant 0 : i32
    %c0_i32_0 = arith.constant 0 : i32
    %c0_i32_1 = arith.constant 0 : i32
    return %c0_i32, %c0_i32_0 : i32, i32
  }
  func.func @transform_3(%arg0: i32) -> (i32, i32) {
    %c0_i32 = arith.constant 0 : i32
    %c0_i32_0 = arith.constant 0 : i32
    return %arg0, %c0_i32 : i32, i32
  }
}

</mosaic_0001>

<llo_original>
// kernel: tpu_custom_call.1
$region0: #{tpu_custom_call.1}
  #allocation0 [shape = 'u32[]', space=smem, size = 0x4, offset = 0x4, fixed_abs, tag = 'smem constant byte address 0x4 - core index']
  #allocation1 [shape = 'u32[72,128]{1,0:T(1,128)}', space=vmem, size = 0x9000, scoped, tag = 'internal scratch']
  %s0 = inlined_call_operand.hbm [shape: f32[8,10], index: 0, kind: input, shape index: {}]
  %s1 = inlined_call_operand.hbm [shape: f32[10,128], index: 1, kind: input, shape index: {}]
  %s2 = inlined_call_operand.vmem [shape: f32[1,128], index: 2, kind: input, shape index: {}]
  %s3 = inlined_call_operand.hbm [shape: f32[8,128], index: 3, kind: output, shape index: {}]
  %s4 = sld [smem:[#allocation0]]
  $region30: #{tpu_custom_call.1} parent=0
    _
  %s6 = ssub.s32 1, %s4
  %s7 = scalar_select 0, %s6, %s4
  $region1: #{tpu_custom_call.1} parent=0
    #allocation2 [shape = 'u8[4096]{0}', space=vmem, size = 0x1000, scoped, tag = 'input window, operand 0, single buffered']
    #allocation3 [shape = 's32[1]{0}', space=sflag, size = 0x4, scoped, tag = 'scoped memory for tpu_custom_call.1']
    #allocation4 [shape = 's32[1]{0}', space=sflag, size = 0x4, scoped, tag = 'scoped memory for tpu_custom_call.1']
    #allocation5 [shape = 'u8[8192]{0}', space=vmem, size = 0x2000, scoped, tag = 'input window, operand 1, single buffered']
    #allocation6 [shape = 's32[1]{0}', space=sflag, size = 0x4, scoped, tag = 'scoped memory for tpu_custom_call.1']
    #allocation7 [shape = 'u8[4096]{0}', space=vmem, size = 0x1000, scoped, tag = 'output window, operand 0, single buffered']
    %8 = vsyncpa [#allocation3], 0
    %9 = vsyncpa [#allocation6], 0
    %10 = vsyncpa [#allocation4], 0
    // Predicated region
    $region2: #{tpu_custom_call.1} parent=1 // pred_check
      _
    $region3: #{tpu_custom_call.1} parent=1 // pred_check_branch
      %12 = sbr.rel (0) target = $region5
    $region4: #{tpu_custom_call.1} parent=1 // pred_region
      %14 = vsyncadd [#allocation3], 0
      %s16 = sshll.u32 %s0, 4
      %s17 = int_to_ptr.hbm [resolvable:$true] %s16
      %s18 = sshll.u32 [#allocation2], 4
      %s19 = int_to_ptr.vmem [resolvable:$true] %s18
      %21 = dma.hbm_to_vmem [thread:$0]  %s17, 128, %s19, [#allocation3]
    $region5: #{tpu_custom_call.1} parent=1 // pred_fallthru
      _
    // Predicated region
    $region6: #{tpu_custom_call.1} parent=1 // pred_check
      _
    $region7: #{tpu_custom_call.1} parent=1 // pred_check_branch
      %23 = sbr.rel (0) target = $region9
    $region8: #{tpu_custom_call.1} parent=1 // pred_region
      %25 = vsyncadd [#allocation6], 0
      %s26 = sshll.u32 %s1, 4
      %s27 = int_to_ptr.hbm [resolvable:$true] %s26
      %s28 = sshll.u32 [#allocation5], 4
      %s29 = int_to_ptr.vmem [resolvable:$true] %s28
      %34 = dma.hbm_to_vmem [thread:$0]  %s27, 256, %s29, [#allocation6], 128, 128, 8
    $region9: #{tpu_custom_call.1} parent=1 // pred_fallthru
      _
    // Predicated region
    $region10: #{tpu_custom_call.1} parent=1 // pred_check
      _
    $region11: #{tpu_custom_call.1} parent=1 // pred_check_branch
      %36 = sbr.rel (0) target = $region13
    $region12: #{tpu_custom_call.1} parent=1 // pred_region
      _
    $region13: #{tpu_custom_call.1} parent=1 // pred_fallthru
      _
    // Predicated region
    $region14: #{tpu_custom_call.1} parent=1 // pred_check
      _
    $region15: #{tpu_custom_call.1} parent=1 // pred_check_branch
      %38 = sbr.rel (0) target = $region17
    $region16: #{tpu_custom_call.1} parent=1 // pred_region
      %40 = dma.done [#allocation3], 128
    $region17: #{tpu_custom_call.1} parent=1 // pred_fallthru
      _
    // Predicated region
    $region18: #{tpu_custom_call.1} parent=1 // pred_check
      _
    $region19: #{tpu_custom_call.1} parent=1 // pred_check_branch
      %42 = sbr.rel (0) target = $region21
    $region20: #{tpu_custom_call.1} parent=1 // pred_region
      %44 = dma.done [#allocation6], 256
    $region21: #{tpu_custom_call.1} parent=1 // pred_fallthru
      _
    %v45 = vld [vmem:[#allocation2] sm:$0xff]
    %v46 = vld [vmem:[#allocation5] sm:$0xff]
    %v47 = vld [vmem:[#allocation5 + $0x8] sm:$0x3]
    %v48 = vld [vmem:[%s2] sm:$0x1]
    %v50 = vperm.slane %v48, 0
    %vm52 = vcmask 80896
    %v54 = vsel %vm52, %v45, 0
    %vm56 = vcmask 1041408
    %v58 = vsel %vm56, %v47, 0
    %60 = vmatpush.msra.mxu0 0.0
    %61 = vmatpush.msra.mxu0 0.0
    %62 = vmatpush.msra.mxu0 0.0
    %63 = vmatpush.msra.mxu0 0.0
    %64 = vmatpush.msra.mxu0 0.0
    %65 = vmatpush.msra.mxu0 0.0
    %66 = vmatpush.msra.mxu0 0.0
    %67 = vmatpush.msra.mxu0 0.0
    %68 = vmatpush.msra.mxu0 0.0
    %69 = vmatpush.msra.mxu0 0.0
    %70 = vmatpush.msra.mxu0 0.0
    %71 = vmatpush.msra.mxu0 0.0
    %72 = vmatpush.msra.mxu0 0.0
    %73 = vmatpush.msra.mxu0 0.0
    %74 = vmatpush.msra.mxu0 %v58
    %75 = vmatpush.msra.mxu0 %v46
    %76 = vmatmul.f32.gmra.mxu0 %v54
    %v77 = vpop.f32.mrf.mxu0
    %v78 = vadd.f32 %v50, %v77
    %79 = vdwg.mxu0
    %80 = vst [vmem:[#allocation7] sm:$0xff] %v78
    // Predicated region
    $region22: #{tpu_custom_call.1} parent=1 // pred_check
      _
    $region23: #{tpu_custom_call.1} parent=1 // pred_check_branch
      %82 = sbr.rel (0) target = $region25
    $region24: #{tpu_custom_call.1} parent=1 // pred_region
      %84 = vsyncadd [#allocation4], 0
      %s86 = sshll.u32 [#allocation7], 4
      %s87 = int_to_ptr.vmem [resolvable:$true] %s86
      %s88 = sshll.u32 %s3, 4
      %s89 = int_to_ptr.hbm [resolvable:$true] %s88
      %91 = dma.vmem_to_hbm [thread:$0]  %s87, 128, %s89, [#allocation4]
    $region25: #{tpu_custom_call.1} parent=1 // pred_fallthru
      _
    // Predicated region
    $region26: #{tpu_custom_call.1} parent=1 // pred_check
      _
    $region27: #{tpu_custom_call.1} parent=1 // pred_check_branch
      %93 = sbr.rel (0) target = $region29
    $region28: #{tpu_custom_call.1} parent=1 // pred_region
      %95 = dma.done [#allocation4], 128
    $region29: #{tpu_custom_call.1} parent=1 // pred_fallthru
      _
    %96 = vsyncpa [#allocation3], 1
    %97 = vsyncpa [#allocation6], 1
    %98 = vsyncpa [#allocation4], 1

</llo_original>
